<compile_context>
chip_gen: v5e
topology: v5e:2x2
jax: 0.10.0
libtpu: 0.0.40
codegen_flags: <defaults>
</compile_context>

<pallas_src>
import functools

import numpy as np
import jax
import jax.numpy as jnp
from jax import lax
from jax.experimental import pallas as pl
from jax.experimental.pallas import tpu as pltpu

TARGET_LEVEL = 10.0 ** (-25.0 / 20.0)   # -25 dBFS target used by _snr_mixer
_LANE = 128


def _round_up(x, m):
    return ((x + m - 1) // m) * m


@functools.lru_cache(maxsize=None)
def _vmem_config():
    """Generation-aware VMEM budgets (v5e/v6e: 128 MiB, v7x-class: 64 MiB)."""
    try:
        cap = int(pltpu.get_tpu_info().vmem_capacity_bytes)
    except Exception:
        cap = 64 << 20
    if cap >= (100 << 20):
        # v5e / v6e: plenty of VMEM, single TensorCore -> large fused window.
        return {"vmem_limit": 96 << 20, "fast_cap": 72 << 20,
                "tiled_budget": 48 << 20}
    # v7x-class (64 MiB VMEM, 2 TensorCores) or unknown: keep the fused window
    # small so longer clips use the megacore-parallel tiled path instead.
    return {"vmem_limit": 32 << 20, "fast_cap": 16 << 20,
            "tiled_budget": 20 << 20}


# ---------------------------------------------------------------------------
# Shared scalar glue (exactly mirrors torch's _snr_mixer), on (1,1) tensors so
# sqrt/where/div stay on the VPU/EUP.
# ---------------------------------------------------------------------------
def _mix_scalars(ssc, ssn, snr_gain, inv_bt, inv_t):
    rms_c = jnp.sqrt(ssc * inv_bt)
    scalarclean = TARGET_LEVEL / jnp.where(rms_c == 0.0, 1.0, rms_c)
    rms_c2 = scalarclean * rms_c                       # rms of rescaled clean
    rms_n = jnp.sqrt(ssn * inv_t)
    scalarnoise = TARGET_LEVEL / jnp.where(rms_n == 0.0, 1.0, rms_n)
    rms_n2 = jnp.where(scalarnoise * rms_n == 0.0, 1.0, scalarnoise * rms_n)
    noisescalar = jnp.sqrt(rms_c2 / snr_gain / rms_n2)
    return scalarclean, scalarnoise * noisescalar


# ---------------------------------------------------------------------------
# FAST path: fully fused, grid-less (single VMEM buffer per operand)
# ---------------------------------------------------------------------------
def _fused_kernel(p_ref, x_ref, n_ref, o_ref):
    x = x_ref[...].astype(jnp.float32)             # (B, T)
    n = n_ref[...].astype(jnp.float32)             # (1, T)
    # Lane-major reduction: VPU vreg accumulation along T, tiny final reduce.
    ssc = jnp.sum(jnp.sum(x * x, axis=1, keepdims=True), axis=0, keepdims=True)
    ssn = jnp.sum(n * n, axis=1, keepdims=True)    # (1, 1)
    sc, sn = _mix_scalars(ssc, ssn, p_ref[0], p_ref[1], p_ref[2])
    o_ref[...] = (x * sc + n * sn).astype(o_ref.dtype)


def _fused_call(params, clean, noise2d, vmem_limit):
    B, T = clean.shape
    # TODO(synk): input_output_aliases={1: 0} would let the output reuse the
    # clean HBM buffer, but in eager / non-donated contexts it forces a
    # defensive copy (or clobbers the caller's array), so it is left off.
    return pl.pallas_call(
        _fused_kernel,
        out_shape=jax.ShapeDtypeStruct((B, T), clean.dtype),
        in_specs=[pl.BlockSpec(memory_space=pltpu.MemorySpace.SMEM),   # params
                  pl.BlockSpec(memory_space=pltpu.MemorySpace.VMEM),   # clean
                  pl.BlockSpec(memory_space=pltpu.MemorySpace.VMEM)],  # noise
        out_specs=pl.BlockSpec(memory_space=pltpu.MemorySpace.VMEM),
        compiler_params=pltpu.CompilerParams(vmem_limit_bytes=vmem_limit),
    )(params, clean, noise2d)


# ---------------------------------------------------------------------------
# TILED path, pass 1: per-block partial sum-of-squares (parallel grid,
# ragged tail masked with broadcasted_iota -> no host padding needed)
# ---------------------------------------------------------------------------
def _partial_sumsq_kernel(x_ref, n_ref, pc_ref, pn_ref, *, t_true, tc):
    j = pl.program_id(0)
    limit = t_true - j * tc                         # valid columns in block j
    x = x_ref[...].astype(jnp.float32)              # (B, tc)
    n = n_ref[...].astype(jnp.float32)              # (1, tc)
    xm = jnp.where(lax.broadcasted_iota(jnp.int32, x.shape, 1) < limit, x, 0.0)
    nm = jnp.where(lax.broadcasted_iota(jnp.int32, n.shape, 1) < limit, n, 0.0)
    pc = jnp.sum(jnp.sum(xm * xm, axis=1, keepdims=True), axis=0, keepdims=True)
    pn = jnp.sum(nm * nm, axis=1, keepdims=True)
    lane0 = lax.broadcasted_iota(jnp.int32, (1, _LANE), 1) == 0
    pc_ref[...] = jnp.where(lane0, pc, 0.0)         # partial lives in lane 0
    pn_ref[...] = jnp.where(lane0, pn, 0.0)


def _partial_sumsq_call(clean, noise2d, tc, g, vmem_limit):
    B, _ = clean.shape
    kern = functools.partial(_partial_sumsq_kernel, t_true=clean.shape[1], tc=tc)
    return pl.pallas_call(
        kern,
        out_shape=(jax.ShapeDtypeStruct((1, g * _LANE), jnp.float32),
                   jax.ShapeDtypeStruct((1, g * _LANE), jnp.float32)),
        grid=(g,),
        in_specs=[pl.BlockSpec((B, tc), lambda j: (0, j)),
                  pl.BlockSpec((1, tc), lambda j: (0, j))],
        out_specs=(pl.BlockSpec((1, _LANE), lambda j: (0, j)),
                   pl.BlockSpec((1, _LANE), lambda j: (0, j))),
        compiler_params=pltpu.CompilerParams(
            dimension_semantics=("parallel",),
            vmem_limit_bytes=vmem_limit),
    )(clean, noise2d)


# ---------------------------------------------------------------------------
# TILED path, pass 2: elementwise mix; scalar glue folded in-kernel from the
# (tiny, resident) partial-sum arrays.  Partial last output block: the ragged
# region is not written back by Pallas, so no masking is needed here.
# ---------------------------------------------------------------------------
def _mix_kernel(p_ref, pc_ref, pn_ref, x_ref, n_ref, o_ref):
    ssc = jnp.sum(pc_ref[...], axis=1, keepdims=True)   # (1, 1)
    ssn = jnp.sum(pn_ref[...], axis=1, keepdims=True)
    sc, sn = _mix_scalars(ssc, ssn, p_ref[0], p_ref[1], p_ref[2])
    o_ref[...] = (x_ref[...].astype(jnp.float32) * sc
                  + n_ref[...].astype(jnp.float32) * sn).astype(o_ref.dtype)


def _mix_call(params, pc, pn, clean, noise2d, tc, g, vmem_limit):
    B, T = clean.shape
    gp = g * _LANE
    return pl.pallas_call(
        _mix_kernel,
        out_shape=jax.ShapeDtypeStruct((B, T), clean.dtype),
        grid=(g,),
        in_specs=[pl.BlockSpec(memory_space=pltpu.MemorySpace.SMEM),   # params
                  pl.BlockSpec((1, gp), lambda j: (0, 0)),             # pc
                  pl.BlockSpec((1, gp), lambda j: (0, 0)),             # pn
                  pl.BlockSpec((B, tc), lambda j: (0, j)),             # clean
                  pl.BlockSpec((1, tc), lambda j: (0, j))],            # noise
        out_specs=pl.BlockSpec((B, tc), lambda j: (0, j)),
        compiler_params=pltpu.CompilerParams(
            dimension_semantics=("parallel",),
            vmem_limit_bytes=vmem_limit),
    )(params, pc, pn, clean, noise2d)


# ---------------------------------------------------------------------------
# _snr_mixer semantics (exactly mirrors the torch module), single jit dispatch
# ---------------------------------------------------------------------------
@functools.partial(jax.jit, static_argnames=("tile_t", "force_tiled"))
def _snr_mixer_impl(clean, noise, snr, tile_t=None, force_tiled=False):
    B, T = clean.shape
    noise2d = jnp.reshape(noise, (1, -1)).astype(jnp.float32)
    if noise2d.shape[1] != T:
        raise ValueError("noise length must match the clean length")

    cfg = _vmem_config()
    snr_gain = 10.0 ** (jnp.asarray(snr, jnp.float32) / 20.0)
    params = jnp.stack([snr_gain.astype(jnp.float32),
                        jnp.float32(1.0 / (B * T)),      # true-length means
                        jnp.float32(1.0 / T)])

    rows_b = _round_up(B, 8)
    # Physical (sublane-padded) single-buffered VMEM footprint of the fused path.
    fast_bytes = (2 * rows_b + 8) * T * 4
    use_fast = ((not force_tiled) and (T % _LANE == 0)
                and fast_bytes <= cfg["fast_cap"])

    if use_fast:
        return _fused_call(params, clean, noise2d, cfg["vmem_limit"])

    # ---- tiled two-pass path (arbitrary / long T, megacore friendly) -------
    if tile_t is not None:
        tc = max(_LANE, _round_up(int(tile_t), _LANE))
    else:
        rows_phys = 2 * rows_b + 8                 # clean + out + noise sublanes
        tc = cfg["tiled_budget"] // (2 * 4 * rows_phys)   # 2x = double buffering
        tc = max(8 * _LANE, (tc // 1024) * 1024)
    tc = min(tc, _round_up(T, _LANE))
    g = -(-T // tc)

    pc, pn = _partial_sumsq_call(clean, noise2d, tc, g, cfg["vmem_limit"])
    return _mix_call(params, pc, pn, clean, noise2d, tc, g, cfg["vmem_limit"])


def snr_mixer(clean, noise, snr, *, tile_t=None, force_tiled=False):
    return _snr_mixer_impl(clean, noise, snr, tile_t=tile_t,
                           force_tiled=force_tiled)


# ---------------------------------------------------------------------------
# AddRir wrapper (host-side glue: apply prob, noise pick, concatenation)
# ---------------------------------------------------------------------------
class AddRir:
    def __init__(self, apply_prob=0.5, num_noise=4, noise_len=1500, seed=0):
        # TODO(synk): the real module downloads RIRS_NOISES wavs, sox-remixes
        # them and loads with torchaudio; here the noise bank is synthesized
        # deterministically in-script.
        self.apply_prob = float(apply_prob)
        self._host_rng = np.random.default_rng(seed)      # no device syncs
        keys = jax.random.split(jax.random.PRNGKey(seed), num_noise)
        self.noise_bank = [np.asarray(jax.random.normal(k, (noise_len,),
                                                        jnp.float32))
                           for k in keys]
        self._noise_cache = {}         # (noise index, T) -> device array
        self.last_snr = None
        self.last_noise = None

    def _concatenate_noise_sample(self, noise, len_clean):
        # Mirrors the torch helper (fixed 16000-sample zero gap).
        noise = np.asarray(noise, dtype=np.float32).reshape(-1)
        gap = np.zeros(16000, dtype=np.float32)
        while noise.size <= len_clean:
            noiseconcat = np.append(noise, gap)
            noise = np.append(noiseconcat, noise)
        if noise.size > len_clean:
            noise = noise[:len_clean]
        return noise

    def _get_noise(self, idx, length):
        key = (idx, length)
        if key not in self._noise_cache:
            n = self.noise_bank[idx]
            if n.shape[-1] > length:
                n = n[..., :length]
            n = self._concatenate_noise_sample(n, length)
            self._noise_cache[key] = jnp.asarray(n, dtype=jnp.float32)
        return self._noise_cache[key]

    def __call__(self, x):
        # Host numpy RNG mirrors torch.rand / np.random.choice without device
        # round-trips.
        if self._host_rng.random() > self.apply_prob:
            return x
        snr = float(self._host_rng.choice(np.array([5.0, 10.0, 15.0])))
        idx = int(self._host_rng.integers(0, len(self.noise_bank)))
        noise = self._get_noise(idx, x.shape[-1])
        self.last_snr, self.last_noise = snr, noise
        return snr_mixer(x, noise, snr)


# Pure-JAX reference of _snr_mixer for verification.
def _ref_snr_mixer(clean, noise, snr):
    rms_c = jnp.sqrt(jnp.mean(clean.astype(jnp.float32) ** 2))
    rms_c = jnp.where(rms_c == 0.0, 1.0, rms_c)
    sc = TARGET_LEVEL / rms_c
    cleans = clean * sc
    rms_c = jnp.sqrt(jnp.mean(cleans ** 2))
    rms_n = jnp.sqrt(jnp.mean(noise.astype(jnp.float32) ** 2))
    rms_n = jnp.where(rms_n == 0.0, 1.0, rms_n)
    sn = TARGET_LEVEL / rms_n
    noises = noise * sn
    rms_n = jnp.sqrt(jnp.mean(noises ** 2))
    rms_n = jnp.where(rms_n == 0.0, 1.0, rms_n)
    ns = jnp.sqrt(rms_c / (10.0 ** (snr / 20.0)) / rms_n)
    return cleans + noises * ns


if __name__ == "__main__":
    # --- fast (fused, VMEM-resident, grid-less) path via the module wrapper --
    B, T = 2, 4096
    x = jax.random.normal(jax.random.PRNGKey(0), (B, T), jnp.float32)

    module = AddRir(apply_prob=1.0, num_noise=4, noise_len=1500, seed=0)
    out = jax.block_until_ready(module(x))
    assert out.shape == x.shape and out.dtype == x.dtype
    ref = _ref_snr_mixer(x, module.last_noise[None, :], module.last_snr)
    np.testing.assert_allclose(np.asarray(out), np.asarray(ref),
                               rtol=1e-5, atol=1e-5)

    # --- tiled two-pass path (forced), non-128-aligned length ---------------
    # Exercises the ragged-tail masking in pass 1 and the partial last output
    # block in pass 2 (no host-side padding or slicing anywhere).
    T2 = 12345
    x2 = jax.random.normal(jax.random.PRNGKey(1), (B, T2), jnp.float32)
    n2 = jax.random.normal(jax.random.PRNGKey(2), (T2,), jnp.float32)
    out2 = jax.block_until_ready(
        snr_mixer(x2, n2, 10.0, tile_t=4096, force_tiled=True))
    assert out2.shape == x2.shape and out2.dtype == x2.dtype
    ref2 = _ref_snr_mixer(x2, n2[None, :], 10.0)
    np.testing.assert_allclose(np.asarray(out2), np.asarray(ref2),
                               rtol=1e-5, atol=1e-5)

    print("KERNEL_OK")
</pallas_src>

<mosaic_0001>
module attributes {stable_mosaic.version = 11 : i64} {
  func.func @_fused_kernel(%arg0: memref<3xf32, #tpu.memory_space<smem>>, %arg1: memref<2x4096xf32, #tpu.memory_space<vmem>>, %arg2: memref<1x4096xf32, #tpu.memory_space<vmem>>, %arg3: memref<2x4096xf32, #tpu.memory_space<vmem>>) attributes {dimension_semantics = [], scalar_prefetch = 0 : i64, scratch_operands = 0 : i64, tpu.core_type = #tpu.core_type<tc>} {
    %c0 = arith.constant 0 : index
    %c0_0 = arith.constant 0 : index
    %0 = vector.load %arg1[%c0, %c0_0] : memref<2x4096xf32, #tpu.memory_space<vmem>>, vector<2x4096xf32>
    %c0_1 = arith.constant 0 : index
    %c0_2 = arith.constant 0 : index
    %1 = vector.load %arg2[%c0_1, %c0_2] : memref<1x4096xf32, #tpu.memory_space<vmem>>, vector<1x4096xf32>
    %2 = arith.mulf %0, %0 : vector<2x4096xf32>
    %cst = arith.constant dense<0.000000e+00> : vector<2xf32>
    %3 = vector.multi_reduction <add>, %2, %cst [1] : vector<2x4096xf32> to vector<2xf32>
    %4 = vector.shape_cast %3 : vector<2xf32> to vector<2x1xf32>
    %cst_3 = arith.constant dense<0.000000e+00> : vector<1xf32>
    %5 = vector.multi_reduction <add>, %4, %cst_3 [0] : vector<2x1xf32> to vector<1xf32>
    %6 = vector.shape_cast %5 : vector<1xf32> to vector<1x1xf32>
    %7 = arith.mulf %1, %1 : vector<1x4096xf32>
    %cst_4 = arith.constant dense<0.000000e+00> : vector<1xf32>
    %8 = vector.multi_reduction <add>, %7, %cst_4 [1] : vector<1x4096xf32> to vector<1xf32>
    %9 = vector.shape_cast %8 : vector<1xf32> to vector<1x1xf32>
    %c0_5 = arith.constant 0 : index
    %10 = memref.load %arg0[%c0_5] : memref<3xf32, #tpu.memory_space<smem>>
    %c1 = arith.constant 1 : index
    %11 = memref.load %arg0[%c1] : memref<3xf32, #tpu.memory_space<smem>>
    %c2 = arith.constant 2 : index
    %12 = memref.load %arg0[%c2] : memref<3xf32, #tpu.memory_space<smem>>
    %13 = vector.broadcast %11 : f32 to vector<1x1xf32>
    %14 = arith.mulf %6, %13 : vector<1x1xf32>
    %15 = math.sqrt %14 : vector<1x1xf32>
    %cst_6 = arith.constant 0.000000e+00 : f32
    %16 = vector.broadcast %cst_6 : f32 to vector<1x1xf32>
    %17 = arith.cmpf oeq, %15, %16 : vector<1x1xf32>
    %cst_7 = arith.constant 1.000000e+00 : f32
    %18 = vector.broadcast %cst_7 : f32 to vector<1x1xf32>
    %19 = arith.select %17, %18, %15 : vector<1x1xi1>, vector<1x1xf32>
    %cst_8 = arith.constant 0.0562341325 : f32
    %20 = vector.broadcast %cst_8 : f32 to vector<1x1xf32>
    %21 = arith.divf %20, %19 : vector<1x1xf32>
    %22 = arith.mulf %21, %15 : vector<1x1xf32>
    %23 = vector.broadcast %12 : f32 to vector<1x1xf32>
    %24 = arith.mulf %9, %23 : vector<1x1xf32>
    %25 = math.sqrt %24 : vector<1x1xf32>
    %cst_9 = arith.constant 0.000000e+00 : f32
    %26 = vector.broadcast %cst_9 : f32 to vector<1x1xf32>
    %27 = arith.cmpf oeq, %25, %26 : vector<1x1xf32>
    %cst_10 = arith.constant 1.000000e+00 : f32
    %28 = vector.broadcast %cst_10 : f32 to vector<1x1xf32>
    %29 = arith.select %27, %28, %25 : vector<1x1xi1>, vector<1x1xf32>
    %cst_11 = arith.constant 0.0562341325 : f32
    %30 = vector.broadcast %cst_11 : f32 to vector<1x1xf32>
    %31 = arith.divf %30, %29 : vector<1x1xf32>
    %32 = arith.mulf %31, %25 : vector<1x1xf32>
    %cst_12 = arith.constant 0.000000e+00 : f32
    %33 = vector.broadcast %cst_12 : f32 to vector<1x1xf32>
    %34 = arith.cmpf oeq, %32, %33 : vector<1x1xf32>
    %35 = arith.mulf %31, %25 : vector<1x1xf32>
    %cst_13 = arith.constant 1.000000e+00 : f32
    %36 = vector.broadcast %cst_13 : f32 to vector<1x1xf32>
    %37 = arith.select %34, %36, %35 : vector<1x1xi1>, vector<1x1xf32>
    %38 = vector.broadcast %10 : f32 to vector<1x1xf32>
    %39 = arith.divf %22, %38 : vector<1x1xf32>
    %40 = arith.divf %39, %37 : vector<1x1xf32>
    %41 = math.sqrt %40 : vector<1x1xf32>
    %42 = arith.mulf %31, %41 : vector<1x1xf32>
    %43 = vector.broadcast %21 : vector<1x1xf32> to vector<2x4096xf32>
    %44 = arith.mulf %0, %43 : vector<2x4096xf32>
    %45 = vector.broadcast %42 : vector<1x1xf32> to vector<1x4096xf32>
    %46 = arith.mulf %1, %45 : vector<1x4096xf32>
    %47 = vector.broadcast %46 : vector<1x4096xf32> to vector<2x4096xf32>
    %48 = arith.addf %44, %47 : vector<2x4096xf32>
    %c0_14 = arith.constant 0 : index
    %c0_15 = arith.constant 0 : index
    %49 = vector.load %arg3[%c0_14, %c0_15] : memref<2x4096xf32, #tpu.memory_space<vmem>>, vector<2x4096xf32>
    tpu.vector_store %arg3[%c0_14, %c0_15], %48 {strides = array<i32>} : memref<2x4096xf32, #tpu.memory_space<vmem>>, vector<2x4096xf32>,
    return
  }
}

</mosaic_0001>

<llo_original>
// kernel: _snr_mixer_impl.1
$region0: #{_snr_mixer_impl.1}
  #allocation0 [shape = 'u32[]', space=smem, size = 0x4, offset = 0x4, fixed_abs, tag = 'smem constant byte address 0x4 - core index']
  #allocation1 [shape = 'u32[72,128]{1,0:T(1,128)}', space=vmem, size = 0x9000, scoped, tag = 'internal scratch']
  %s0 = inlined_call_operand.vmem [shape: f32[3], index: 0, kind: input, shape index: {}]
  %s1 = inlined_call_operand.hbm [shape: f32[2,4096], index: 1, kind: input, shape index: {}]
  %s2 = inlined_call_operand.hbm [shape: f32[1,4096], index: 2, kind: input, shape index: {}]
  %s3 = inlined_call_operand.hbm [shape: f32[2,4096], index: 3, kind: output, shape index: {}]
  %s4 = sld [smem:[#allocation0]]
  $region34: #{_snr_mixer_impl.1} parent=0
    _
  %s6 = ssub.s32 1, %s4
  %s7 = scalar_select 0, %s6, %s4
  $region1: #{_snr_mixer_impl.1} parent=0
    #allocation2 [shape = 'u8[512]{0}', space=smem, size = 0x200, scoped, tag = 'input window, operand 0, single buffered']
    #allocation3 [shape = 's32[1]{0}', space=sflag, size = 0x4, scoped, tag = 'scoped memory for _snr_mixer_impl.1']
    #allocation4 [shape = 's32[1]{0}', space=sflag, size = 0x4, scoped, tag = 'scoped memory for _snr_mixer_impl.1']
    #allocation5 [shape = 's32[1]{0}', space=sflag, size = 0x4, scoped, tag = 'scoped memory for _snr_mixer_impl.1']
    #allocation6 [shape = 'u8[32768]{0}', space=vmem, size = 0x8000, scoped, tag = 'input window, operand 1, single buffered']
    #allocation7 [shape = 'u8[16384]{0}', space=vmem, size = 0x4000, scoped, tag = 'input window, operand 2, single buffered']
    #allocation8 [shape = 's32[1]{0}', space=sflag, size = 0x4, scoped, tag = 'scoped memory for _snr_mixer_impl.1']
    #allocation9 [shape = 'u8[32768]{0}', space=vmem, size = 0x8000, scoped, tag = 'output window, operand 0, single buffered']
    %8 = vsyncpa [#allocation5], 0
    %9 = vsyncpa [#allocation3], 0
    %10 = vsyncpa [#allocation8], 0
    %11 = vsyncpa [#allocation4], 0
    // Predicated region
    $region2: #{_snr_mixer_impl.1} parent=1 // pred_check
      _
    $region3: #{_snr_mixer_impl.1} parent=1 // pred_check_branch
      %13 = sbr.rel (0) target = $region5
    $region4: #{_snr_mixer_impl.1} parent=1 // pred_region
      %15 = vsyncadd [#allocation5], 0
      %s17 = sshll.u32 %s0, 4
      %s18 = int_to_ptr.vmem [resolvable:$true] %s17
      %20 = dma.vmem_to_smem %s18, 16, [#allocation2], [#allocation5]
    $region5: #{_snr_mixer_impl.1} parent=1 // pred_fallthru
      _
    // Predicated region
    $region6: #{_snr_mixer_impl.1} parent=1 // pred_check
      _
    $region7: #{_snr_mixer_impl.1} parent=1 // pred_check_branch
      %22 = sbr.rel (0) target = $region9
    $region8: #{_snr_mixer_impl.1} parent=1 // pred_region
      %24 = vsyncadd [#allocation3], 0
      %s26 = sshll.u32 %s1, 4
      %s27 = int_to_ptr.hbm [resolvable:$true] %s26
      %s28 = sshll.u32 [#allocation6], 4
      %s29 = int_to_ptr.vmem [resolvable:$true] %s28
      %31 = dma.hbm_to_vmem [thread:$0]  %s27, 1024, %s29, [#allocation3]
    $region9: #{_snr_mixer_impl.1} parent=1 // pred_fallthru
      _
    // Predicated region
    $region10: #{_snr_mixer_impl.1} parent=1 // pred_check
      _
    $region11: #{_snr_mixer_impl.1} parent=1 // pred_check_branch
      %33 = sbr.rel (0) target = $region13
    $region12: #{_snr_mixer_impl.1} parent=1 // pred_region
      %35 = vsyncadd [#allocation8], 0
      %s37 = sshll.u32 %s2, 4
      %s38 = int_to_ptr.hbm [resolvable:$true] %s37
      %s39 = sshll.u32 [#allocation7], 4
      %s40 = int_to_ptr.vmem [resolvable:$true] %s39
      %42 = dma.hbm_to_vmem [thread:$0]  %s38, 512, %s40, [#allocation8]
    $region13: #{_snr_mixer_impl.1} parent=1 // pred_fallthru
      _
    // Predicated region
    $region14: #{_snr_mixer_impl.1} parent=1 // pred_check
      _
    $region15: #{_snr_mixer_impl.1} parent=1 // pred_check_branch
      %44 = sbr.rel (0) target = $region17
    $region16: #{_snr_mixer_impl.1} parent=1 // pred_region
      %46 = dma.done [#allocation5], 16
    $region17: #{_snr_mixer_impl.1} parent=1 // pred_fallthru
      _
    // Predicated region
    $region18: #{_snr_mixer_impl.1} parent=1 // pred_check
      _
    $region19: #{_snr_mixer_impl.1} parent=1 // pred_check_branch
      %48 = sbr.rel (0) target = $region21
    $region20: #{_snr_mixer_impl.1} parent=1 // pred_region
      %50 = dma.done [#allocation3], 1024
    $region21: #{_snr_mixer_impl.1} parent=1 // pred_fallthru
      _
    // Predicated region
    $region22: #{_snr_mixer_impl.1} parent=1 // pred_check
      _
    $region23: #{_snr_mixer_impl.1} parent=1 // pred_check_branch
      %52 = sbr.rel (0) target = $region25
    $region24: #{_snr_mixer_impl.1} parent=1 // pred_region
      %54 = dma.done [#allocation8], 512
    $region25: #{_snr_mixer_impl.1} parent=1 // pred_fallthru
      _
    %55 = sfence
    %v56 = vld [vmem:[#allocation6] sm:$0xff]
    %v57 = vld [vmem:[#allocation6 + $0x8] sm:$0xff]
    %v58 = vld [vmem:[#allocation6 + $0x10] sm:$0xff]
    %v59 = vld [vmem:[#allocation6 + $0x18] sm:$0xff]
    %v60 = vld [vmem:[#allocation6 + $0x20] sm:$0xff]
    %v61 = vld [vmem:[#allocation6 + $0x28] sm:$0xff]
    %v62 = vld [vmem:[#allocation6 + $0x30] sm:$0xff]
    %v63 = vld [vmem:[#allocation6 + $0x38] sm:$0xff]
    %v64 = vld [vmem:[#allocation7] sm:$0xff]
    %v65 = vld [vmem:[#allocation7 + $0x8] sm:$0xff]
    %v66 = vld [vmem:[#allocation7 + $0x10] sm:$0xff]
    %v67 = vld [vmem:[#allocation7 + $0x18] sm:$0xff]
    %v68 = vmul.f32 %v56, %v56
    %v69 = vmul.f32 %v57, %v57
    %v70 = vmul.f32 %v58, %v58
    %v71 = vmul.f32 %v59, %v59
    %v72 = vmul.f32 %v60, %v60
    %v73 = vmul.f32 %v61, %v61
    %v74 = vmul.f32 %v62, %v62
    %v75 = vmul.f32 %v63, %v63
    %84 = vst [vmem:[#allocation1] ss:$4 sm:$0xff] %v68
    %s85 = scalar_lea.vmem [#allocation1], 32
    %86 = vst [vmem:[%s85] ss:$4 sm:$0xff] %v69
    %v87 = vld.sshfl [vmem:[#allocation1] sm:$0xff pattern:$0x73625140]
    %v88 = vld.sshfl [vmem:[#allocation1 + $0x8] sm:$0xff pattern:$0x73625140]
    %v89 = vld.sshfl [vmem:[#allocation1 + $0x10] sm:$0xff pattern:$0x73625140]
    %v90 = vld.sshfl [vmem:[#allocation1 + $0x18] sm:$0xff pattern:$0x73625140]
    %v91 = vld.sshfl [vmem:[#allocation1 + $0x20] sm:$0xff pattern:$0x73625140]
    %v92 = vld.sshfl [vmem:[#allocation1 + $0x28] sm:$0xff pattern:$0x73625140]
    %v93 = vld.sshfl [vmem:[#allocation1 + $0x30] sm:$0xff pattern:$0x73625140]
    %v94 = vld.sshfl [vmem:[#allocation1 + $0x38] sm:$0xff pattern:$0x73625140]
    %95 = vst [vmem:[#allocation1] ss:$4 sm:$0xff] %v70
    %96 = vst [vmem:[%s85] ss:$4 sm:$0xff] %v71
    %v97 = vld.sshfl [vmem:[#allocation1] sm:$0xff pattern:$0x73625140]
    %v98 = vld.sshfl [vmem:[#allocation1 + $0x8] sm:$0xff pattern:$0x73625140]
    %v99 = vld.sshfl [vmem:[#allocation1 + $0x10] sm:$0xff pattern:$0x73625140]
    %v100 = vld.sshfl [vmem:[#allocation1 + $0x18] sm:$0xff pattern:$0x73625140]
    %v101 = vld.sshfl [vmem:[#allocation1 + $0x20] sm:$0xff pattern:$0x73625140]
    %v102 = vld.sshfl [vmem:[#allocation1 + $0x28] sm:$0xff pattern:$0x73625140]
    %v103 = vld.sshfl [vmem:[#allocation1 + $0x30] sm:$0xff pattern:$0x73625140]
    %v104 = vld.sshfl [vmem:[#allocation1 + $0x38] sm:$0xff pattern:$0x73625140]
    %105 = vst [vmem:[#allocation1] ss:$4 sm:$0xff] %v72
    %106 = vst [vmem:[%s85] ss:$4 sm:$0xff] %v73
    %v107 = vld.sshfl [vmem:[#allocation1] sm:$0xff pattern:$0x73625140]
    %v108 = vld.sshfl [vmem:[#allocation1 + $0x8] sm:$0xff pattern:$0x73625140]
    %v109 = vld.sshfl [vmem:[#allocation1 + $0x10] sm:$0xff pattern:$0x73625140]
    %v110 = vld.sshfl [vmem:[#allocation1 + $0x18] sm:$0xff pattern:$0x73625140]
    %v111 = vld.sshfl [vmem:[#allocation1 + $0x20] sm:$0xff pattern:$0x73625140]
    %v112 = vld.sshfl [vmem:[#allocation1 + $0x28] sm:$0xff pattern:$0x73625140]
    %v113 = vld.sshfl [vmem:[#allocation1 + $0x30] sm:$0xff pattern:$0x73625140]
    %v114 = vld.sshfl [vmem:[#allocation1 + $0x38] sm:$0xff pattern:$0x73625140]
    %115 = vst [vmem:[#allocation1] ss:$4 sm:$0xff] %v74
    %116 = vst [vmem:[%s85] ss:$4 sm:$0xff] %v75
    %v117 = vld.sshfl [vmem:[#allocation1] sm:$0xff pattern:$0x73625140]
    %v118 = vld.sshfl [vmem:[#allocation1 + $0x8] sm:$0xff pattern:$0x73625140]
    %v119 = vld.sshfl [vmem:[#allocation1 + $0x10] sm:$0xff pattern:$0x73625140]
    %v120 = vld.sshfl [vmem:[#allocation1 + $0x18] sm:$0xff pattern:$0x73625140]
    %v121 = vld.sshfl [vmem:[#allocation1 + $0x20] sm:$0xff pattern:$0x73625140]
    %v122 = vld.sshfl [vmem:[#allocation1 + $0x28] sm:$0xff pattern:$0x73625140]
    %v123 = vld.sshfl [vmem:[#allocation1 + $0x30] sm:$0xff pattern:$0x73625140]
    %v124 = vld.sshfl [vmem:[#allocation1 + $0x38] sm:$0xff pattern:$0x73625140]
    %vm157 = vcmask 1041408
    %v158 = vsel %vm157, %v87, 0.0
    %v159 = vsel %vm157, %v88, 0.0
    %v160 = vadd.f32 %v158, %v159
    %v161 = vsel %vm157, %v89, 0.0
    %v162 = vadd.f32 %v160, %v161
    %v163 = vsel %vm157, %v90, 0.0
    %v164 = vadd.f32 %v162, %v163
    %v165 = vsel %vm157, %v91, 0.0
    %v166 = vadd.f32 %v164, %v165
    %v167 = vsel %vm157, %v92, 0.0
    %v168 = vadd.f32 %v166, %v167
    %v169 = vsel %vm157, %v93, 0.0
    %v170 = vadd.f32 %v168, %v169
    %v171 = vsel %vm157, %v94, 0.0
    %v172 = vadd.f32 %v170, %v171
    %v173 = vsel %vm157, %v97, 0.0
    %v174 = vadd.f32 %v172, %v173
    %v175 = vsel %vm157, %v98, 0.0
    %v176 = vadd.f32 %v174, %v175
    %v177 = vsel %vm157, %v99, 0.0
    %v178 = vadd.f32 %v176, %v177
    %v179 = vsel %vm157, %v100, 0.0
    %v180 = vadd.f32 %v178, %v179
    %v181 = vsel %vm157, %v101, 0.0
    %v182 = vadd.f32 %v180, %v181
    %v183 = vsel %vm157, %v102, 0.0
    %v184 = vadd.f32 %v182, %v183
    %v185 = vsel %vm157, %v103, 0.0
    %v186 = vadd.f32 %v184, %v185
    %v187 = vsel %vm157, %v104, 0.0
    %v188 = vadd.f32 %v186, %v187
    %v189 = vsel %vm157, %v107, 0.0
    %v190 = vadd.f32 %v188, %v189
    %v191 = vsel %vm157, %v108, 0.0
    %v192 = vadd.f32 %v190, %v191
    %v193 = vsel %vm157, %v109, 0.0
    %v194 = vadd.f32 %v192, %v193
    %v195 = vsel %vm157, %v110, 0.0
    %v196 = vadd.f32 %v194, %v195
    %v197 = vsel %vm157, %v111, 0.0
    %v198 = vadd.f32 %v196, %v197
    %v199 = vsel %vm157, %v112, 0.0
    %v200 = vadd.f32 %v198, %v199
    %v201 = vsel %vm157, %v113, 0.0
    %v202 = vadd.f32 %v200, %v201
    %v203 = vsel %vm157, %v114, 0.0
    %v204 = vadd.f32 %v202, %v203
    %v205 = vsel %vm157, %v117, 0.0
    %v206 = vadd.f32 %v204, %v205
    %v207 = vsel %vm157, %v118, 0.0
    %v208 = vadd.f32 %v206, %v207
    %v209 = vsel %vm157, %v119, 0.0
    %v210 = vadd.f32 %v208, %v209
    %v211 = vsel %vm157, %v120, 0.0
    %v212 = vadd.f32 %v210, %v211
    %v213 = vsel %vm157, %v121, 0.0
    %v214 = vadd.f32 %v212, %v213
    %v215 = vsel %vm157, %v122, 0.0
    %v216 = vadd.f32 %v214, %v215
    %v217 = vsel %vm157, %v123, 0.0
    %v218 = vadd.f32 %v216, %v217
    %v219 = vsel %vm157, %v124, 0.0
    %v220 = vadd.f32 %v218, %v219
    %221 = vadd.xlane.f32.xlu0 %v220
    %v222 = vpop.xlane.xlu0 %221
    %v223 = vsel %vm157, %v222, 0.0
    %v224 = vrot.slane %v223, 4
    %v225 = vadd.f32 %v223, %v224
    %v226 = vrot.slane %v225, 2
    %v227 = vadd.f32 %v225, %v226
    %v228 = vrot.slane %v227, 1
    %v229 = vadd.f32 %v227, %v228
    %v230 = vmul.f32 %v64, %v64
    %v231 = vmul.f32 %v65, %v65
    %v232 = vmul.f32 %v66, %v66
    %v233 = vmul.f32 %v67, %v67
    %v238 = vperm.slane %v230, 0
    %v239 = vperm.slane %v230, 1
    %v240 = vperm.slane %v230, 2
    %v241 = vperm.slane %v230, 3
    %v242 = vperm.slane %v230, 4
    %v243 = vperm.slane %v230, 5
    %v244 = vperm.slane %v230, 6
    %v245 = vperm.slane %v230, 7
    %v246 = vperm.slane %v231, 0
    %v247 = vperm.slane %v231, 1
    %v248 = vperm.slane %v231, 2
    %v249 = vperm.slane %v231, 3
    %v250 = vperm.slane %v231, 4
    %v251 = vperm.slane %v231, 5
    %v252 = vperm.slane %v231, 6
    %v253 = vperm.slane %v231, 7
    %v254 = vperm.slane %v232, 0
    %v255 = vperm.slane %v232, 1
    %v256 = vperm.slane %v232, 2
    %v257 = vperm.slane %v232, 3
    %v258 = vperm.slane %v232, 4
    %v259 = vperm.slane %v232, 5
    %v260 = vperm.slane %v232, 6
    %v261 = vperm.slane %v232, 7
    %v262 = vperm.slane %v233, 0
    %v263 = vperm.slane %v233, 1
    %v264 = vperm.slane %v233, 2
    %v265 = vperm.slane %v233, 3
    %v266 = vperm.slane %v233, 4
    %v267 = vperm.slane %v233, 5
    %v268 = vperm.slane %v233, 6
    %v269 = vperm.slane %v233, 7
    %vm302 = vcmask 1040384
    %v303 = vsel %vm302, %v238, 0.0
    %v304 = vsel %vm302, %v239, 0.0
    %v305 = vadd.f32 %v303, %v304
    %v306 = vsel %vm302, %v240, 0.0
    %v307 = vadd.f32 %v305, %v306
    %v308 = vsel %vm302, %v241, 0.0
    %v309 = vadd.f32 %v307, %v308
    %v310 = vsel %vm302, %v242, 0.0
    %v311 = vadd.f32 %v309, %v310
    %v312 = vsel %vm302, %v243, 0.0
    %v313 = vadd.f32 %v311, %v312
    %v314 = vsel %vm302, %v244, 0.0
    %v315 = vadd.f32 %v313, %v314
    %v316 = vsel %vm302, %v245, 0.0
    %v317 = vadd.f32 %v315, %v316
    %v318 = vsel %vm302, %v246, 0.0
    %v319 = vadd.f32 %v317, %v318
    %v320 = vsel %vm302, %v247, 0.0
    %v321 = vadd.f32 %v319, %v320
    %v322 = vsel %vm302, %v248, 0.0
    %v323 = vadd.f32 %v321, %v322
    %v324 = vsel %vm302, %v249, 0.0
    %v325 = vadd.f32 %v323, %v324
    %v326 = vsel %vm302, %v250, 0.0
    %v327 = vadd.f32 %v325, %v326
    %v328 = vsel %vm302, %v251, 0.0
    %v329 = vadd.f32 %v327, %v328
    %v330 = vsel %vm302, %v252, 0.0
    %v331 = vadd.f32 %v329, %v330
    %v332 = vsel %vm302, %v253, 0.0
    %v333 = vadd.f32 %v331, %v332
    %v334 = vsel %vm302, %v254, 0.0
    %v335 = vadd.f32 %v333, %v334
    %v336 = vsel %vm302, %v255, 0.0
    %v337 = vadd.f32 %v335, %v336
    %v338 = vsel %vm302, %v256, 0.0
    %v339 = vadd.f32 %v337, %v338
    %v340 = vsel %vm302, %v257, 0.0
    %v341 = vadd.f32 %v339, %v340
    %v342 = vsel %vm302, %v258, 0.0
    %v343 = vadd.f32 %v341, %v342
    %v344 = vsel %vm302, %v259, 0.0
    %v345 = vadd.f32 %v343, %v344
    %v346 = vsel %vm302, %v260, 0.0
    %v347 = vadd.f32 %v345, %v346
    %v348 = vsel %vm302, %v261, 0.0
    %v349 = vadd.f32 %v347, %v348
    %v350 = vsel %vm302, %v262, 0.0
    %v351 = vadd.f32 %v349, %v350
    %v352 = vsel %vm302, %v263, 0.0
    %v353 = vadd.f32 %v351, %v352
    %v354 = vsel %vm302, %v264, 0.0
    %v355 = vadd.f32 %v353, %v354
    %v356 = vsel %vm302, %v265, 0.0
    %v357 = vadd.f32 %v355, %v356
    %v358 = vsel %vm302, %v266, 0.0
    %v359 = vadd.f32 %v357, %v358
    %v360 = vsel %vm302, %v267, 0.0
    %v361 = vadd.f32 %v359, %v360
    %v362 = vsel %vm302, %v268, 0.0
    %v363 = vadd.f32 %v361, %v362
    %v364 = vsel %vm302, %v269, 0.0
    %v365 = vadd.f32 %v363, %v364
    %366 = vadd.xlane.f32.xlu0 %v365
    %v367 = vpop.xlane.xlu0 %366
    %s368 = sld [smem:[#allocation2]]
    %s369 = sld [smem:[#allocation2 + $0x1]]
    %s370 = sld [smem:[#allocation2 + $0x2]]
    %v371 = vstv %s369
    %v372 = vmul.f32 %v229, %v371
    %v373 = vrsqrt.pop %v372
    %v374 = vmul.f32 %v373, %v372
    %v375 = vmul.f32 %v374, %v373
    %v376 = vmul.f32 0.5, %v375
    %v377 = vsub.f32 1.5, %v376
    %v378 = vmul.f32 %v373, %v377
    %v379 = vmul.f32 %v372, %v378
    %vm380 = vcmp.eq.f32.partialorder %v372, inf
    %v381 = vsel %vm380, %v372, %v379
    %vm382 = vcmp.eq.f32.partialorder %v372, 0.0
    %v383 = vand.u32 %v372, 2147483648
    %v384 = vsel %vm382, %v383, %v381
    %vm385 = vcmp.eq.f32.partialorder %v384, 0.0
    %v386 = vsel %vm385, 1.0, %v384
    %v387 = vrcp.pop %v386
    %v388 = vmul.f32 %v386, %v387
    %v389 = vsub.f32 1.0, %v388
    %v390 = vmul.f32 %v387, %v389
    %v391 = vadd.f32 %v387, %v390
    %vm392 = vweird.f32 %v386
    %vm393 = vweird.f32 %v387
    %vm394 = vmor %vm392, %vm393
    %v395 = vsel %vm394, %v387, %v391
    %v396 = vand.u32 2147483647, %v386
    %vm397 = vcmp.eq.f32.partialorder %v396, 8.507059e+37
    %v398 = vand.u32 %v386, 2147483648
    %v399 = vor.u32 1.1754944e-38, %v398
    %v400 = vsel %vm397, %v399, %v395
    %v401 = vmul.f32 0.056234132, %v400
    %v402 = vmul.f32 %v401, %v384
    %v403 = vstv %s370
    %v404 = vmul.f32 %v367, %v403
    %v405 = vrsqrt.pop %v404
    %v406 = vmul.f32 %v405, %v404
    %v407 = vmul.f32 %v406, %v405
    %v408 = vmul.f32 0.5, %v407
    %v409 = vsub.f32 1.5, %v408
    %v410 = vmul.f32 %v405, %v409
    %v411 = vmul.f32 %v404, %v410
    %vm412 = vcmp.eq.f32.partialorder %v404, inf
    %v413 = vsel %vm412, %v404, %v411
    %vm414 = vcmp.eq.f32.partialorder %v404, 0.0
    %v415 = vand.u32 %v404, 2147483648
    %v416 = vsel %vm414, %v415, %v413
    %vm417 = vcmp.eq.f32.partialorder %v416, 0.0
    %v418 = vsel %vm417, 1.0, %v416
    %v419 = vrcp.pop %v418
    %v420 = vmul.f32 %v418, %v419
    %v421 = vsub.f32 1.0, %v420
    %v422 = vmul.f32 %v419, %v421
    %v423 = vadd.f32 %v419, %v422
    %vm424 = vweird.f32 %v418
    %vm425 = vweird.f32 %v419
    %vm426 = vmor %vm424, %vm425
    %v427 = vsel %vm426, %v419, %v423
    %v428 = vand.u32 2147483647, %v418
    %vm429 = vcmp.eq.f32.partialorder %v428, 8.507059e+37
    %v430 = vand.u32 %v418, 2147483648
    %v431 = vor.u32 1.1754944e-38, %v430
    %v432 = vsel %vm429, %v431, %v427
    %v433 = vmul.f32 0.056234132, %v432
    %v434 = vmul.f32 %v433, %v416
    %vm435 = vcmp.eq.f32.partialorder %v434, 0.0
    %v436 = vsel %vm435, 1.0, %v434
    %v437 = vstv %s368
    %v438 = vrcp.pop %v437
    %v439 = vmul.f32 %v437, %v438
    %v440 = vsub.f32 1.0, %v439
    %v441 = vmul.f32 %v438, %v440
    %v442 = vadd.f32 %v438, %v441
    %vm443 = vweird.f32 %v437
    %vm444 = vweird.f32 %v438
    %vm445 = vmor %vm443, %vm444
    %v446 = vsel %vm445, %v438, %v442
    %v447 = vand.u32 2147483647, %v437
    %vm448 = vcmp.eq.f32.partialorder %v447, 8.507059e+37
    %v449 = vand.u32 %v437, 2147483648
    %v450 = vor.u32 1.1754944e-38, %v449
    %v451 = vsel %vm448, %v450, %v446
    %v452 = vmul.f32 %v402, %v451
    %v453 = vrcp.pop %v436
    %v454 = vmul.f32 %v436, %v453
    %v455 = vsub.f32 1.0, %v454
    %v456 = vmul.f32 %v453, %v455
    %v457 = vadd.f32 %v453, %v456
    %vm458 = vweird.f32 %v436
    %vm459 = vweird.f32 %v453
    %vm460 = vmor %vm458, %vm459
    %v461 = vsel %vm460, %v453, %v457
    %v462 = vand.u32 2147483647, %v436
    %vm463 = vcmp.eq.f32.partialorder %v462, 8.507059e+37
    %v464 = vand.u32 %v436, 2147483648
    %v465 = vor.u32 1.1754944e-38, %v464
    %v466 = vsel %vm463, %v465, %v461
    %v467 = vmul.f32 %v452, %v466
    %v468 = vrsqrt.pop %v467
    %v469 = vmul.f32 %v468, %v467
    %v470 = vmul.f32 %v469, %v468
    %v471 = vmul.f32 0.5, %v470
    %v472 = vsub.f32 1.5, %v471
    %v473 = vmul.f32 %v468, %v472
    %v474 = vmul.f32 %v467, %v473
    %vm475 = vcmp.eq.f32.partialorder %v467, inf
    %v476 = vsel %vm475, %v467, %v474
    %vm477 = vcmp.eq.f32.partialorder %v467, 0.0
    %v478 = vand.u32 %v467, 2147483648
    %v479 = vsel %vm477, %v478, %v476
    %v480 = vmul.f32 %v433, %v479
    %v481 = vmul.f32 %v56, %v401
    %v482 = vmul.f32 %v57, %v401
    %v483 = vmul.f32 %v58, %v401
    %v484 = vmul.f32 %v59, %v401
    %v485 = vmul.f32 %v60, %v401
    %v486 = vmul.f32 %v61, %v401
    %v487 = vmul.f32 %v62, %v401
    %v488 = vmul.f32 %v63, %v401
    %v490 = vperm.slane %v480, 0
    %v492 = vmul.f32 %v64, %v490
    %v493 = vmul.f32 %v65, %v490
    %v494 = vmul.f32 %v66, %v490
    %v495 = vmul.f32 %v67, %v490
    %v500 = vperm.slane %v492, 0
    %v501 = vperm.slane %v492, 1
    %v502 = vperm.slane %v492, 2
    %v503 = vperm.slane %v492, 3
    %v504 = vperm.slane %v492, 4
    %v505 = vperm.slane %v492, 5
    %v506 = vperm.slane %v492, 6
    %v507 = vperm.slane %v492, 7
    %v508 = vperm.slane %v493, 0
    %v509 = vperm.slane %v493, 1
    %v510 = vperm.slane %v493, 2
    %v511 = vperm.slane %v493, 3
    %v512 = vperm.slane %v493, 4
    %v513 = vperm.slane %v493, 5
    %v514 = vperm.slane %v493, 6
    %v515 = vperm.slane %v493, 7
    %v516 = vperm.slane %v494, 0
    %v517 = vperm.slane %v494, 1
    %v518 = vperm.slane %v494, 2
    %v519 = vperm.slane %v494, 3
    %v520 = vperm.slane %v494, 4
    %v521 = vperm.slane %v494, 5
    %v522 = vperm.slane %v494, 6
    %v523 = vperm.slane %v494, 7
    %v524 = vperm.slane %v495, 0
    %v525 = vperm.slane %v495, 1
    %v526 = vperm.slane %v495, 2
    %v527 = vperm.slane %v495, 3
    %v528 = vperm.slane %v495, 4
    %v529 = vperm.slane %v495, 5
    %v530 = vperm.slane %v495, 6
    %v531 = vperm.slane %v495, 7
    %v532 = vrot.slane %v501, 6
    %v533 = vrot.slane %v502, 4
    %v534 = vrot.slane %v503, 2
    %v535 = vrot.slane %v505, 6
    %v536 = vrot.slane %v506, 4
    %v537 = vrot.slane %v507, 2
    %v538 = vrot.slane %v509, 6
    %v539 = vrot.slane %v510, 4
    %v540 = vrot.slane %v511, 2
    %v541 = vrot.slane %v513, 6
    %v542 = vrot.slane %v514, 4
    %v543 = vrot.slane %v515, 2
    %v544 = vrot.slane %v517, 6
    %v545 = vrot.slane %v518, 4
    %v546 = vrot.slane %v519, 2
    %v547 = vrot.slane %v521, 6
    %v548 = vrot.slane %v522, 4
    %v549 = vrot.slane %v523, 2
    %v550 = vrot.slane %v525, 6
    %v551 = vrot.slane %v526, 4
    %v552 = vrot.slane %v527, 2
    %v553 = vrot.slane %v529, 6
    %v554 = vrot.slane %v530, 4
    %v555 = vrot.slane %v531, 2
    %v556 = vsel %vm157, %v500, %v532
    %vm557 = vcmask 1045508
    %v558 = vsel %vm557, %v533, %v534
    %vm559 = vcmask 1043456
    %v560 = vsel %vm559, %v556, %v558
    %v561 = vsel %vm157, %v504, %v535
    %v562 = vsel %vm557, %v536, %v537
    %v563 = vsel %vm559, %v561, %v562
    %v564 = vsel %vm157, %v508, %v538
    %v565 = vsel %vm557, %v539, %v540
    %v566 = vsel %vm559, %v564, %v565
    %v567 = vsel %vm157, %v512, %v541
    %v568 = vsel %vm557, %v542, %v543
    %v569 = vsel %vm559, %v567, %v568
    %v570 = vsel %vm157, %v516, %v544
    %v571 = vsel %vm557, %v545, %v546
    %v572 = vsel %vm559, %v570, %v571
    %v573 = vsel %vm157, %v520, %v547
    %v574 = vsel %vm557, %v548, %v549
    %v575 = vsel %vm559, %v573, %v574
    %v576 = vsel %vm157, %v524, %v550
    %v577 = vsel %vm557, %v551, %v552
    %v578 = vsel %vm559, %v576, %v577
    %v579 = vsel %vm157, %v528, %v553
    %v580 = vsel %vm557, %v554, %v555
    %v581 = vsel %vm559, %v579, %v580
    %v590 = vadd.f32 %v481, %v560
    %v591 = vadd.f32 %v482, %v563
    %v592 = vadd.f32 %v483, %v566
    %v593 = vadd.f32 %v484, %v569
    %v594 = vadd.f32 %v485, %v572
    %v595 = vadd.f32 %v486, %v575
    %v596 = vadd.f32 %v487, %v578
    %v597 = vadd.f32 %v488, %v581
    %598 = vst [vmem:[#allocation9] sm:$0xff] %v590
    %599 = vst [vmem:[#allocation9 + $0x8] sm:$0xff] %v591
    %600 = vst [vmem:[#allocation9 + $0x10] sm:$0xff] %v592
    %601 = vst [vmem:[#allocation9 + $0x18] sm:$0xff] %v593
    %602 = vst [vmem:[#allocation9 + $0x20] sm:$0xff] %v594
    %603 = vst [vmem:[#allocation9 + $0x28] sm:$0xff] %v595
    %604 = vst [vmem:[#allocation9 + $0x30] sm:$0xff] %v596
    %605 = vst [vmem:[#allocation9 + $0x38] sm:$0xff] %v597
    // Predicated region
    $region26: #{_snr_mixer_impl.1} parent=1 // pred_check
      _
    $region27: #{_snr_mixer_impl.1} parent=1 // pred_check_branch
      %607 = sbr.rel (0) target = $region29
    $region28: #{_snr_mixer_impl.1} parent=1 // pred_region
      %609 = vsyncadd [#allocation4], 0
      %s611 = sshll.u32 [#allocation9], 4
      %s612 = int_to_ptr.vmem [resolvable:$true] %s611
      %s613 = sshll.u32 %s3, 4
      %s614 = int_to_ptr.hbm [resolvable:$true] %s613
      %616 = dma.vmem_to_hbm [thread:$0]  %s612, 1024, %s614, [#allocation4]
    $region29: #{_snr_mixer_impl.1} parent=1 // pred_fallthru
      _
    // Predicated region
    $region30: #{_snr_mixer_impl.1} parent=1 // pred_check
      _
    $region31: #{_snr_mixer_impl.1} parent=1 // pred_check_branch
      %618 = sbr.rel (0) target = $region33
    $region32: #{_snr_mixer_impl.1} parent=1 // pred_region
      %620 = dma.done [#allocation4], 1024
    $region33: #{_snr_mixer_impl.1} parent=1 // pred_fallthru
      _
    %621 = vsyncpa [#allocation3], 1
    %622 = vsyncpa [#allocation8], 1
    %623 = vsyncpa [#allocation4], 1
    %624 = vsyncpa [#allocation5], 1

</llo_original>
